<compile_context>
chip_gen: v6e
topology: v6e:2x2x1
jax: 0.10.0
libtpu: 0.0.40
codegen_flags: <defaults>
</compile_context>

<pallas_src>
import jax
import jax.numpy as jnp
from jax.experimental import pallas as pl
from jax.experimental.pallas import tpu as pltpu

IN_DIM = 512
HID_DIM = 256
OUT_DIM = 1

_ROW_ALIGN = 32                    # multiple of 8 (f32 sublane), 16 (bf16 packing), 32 (int8/fp8)
_VMEM_LIMIT = 48 * 1024 * 1024     # safe on every gen (v7x physical = 64 MiB), > v5e's 16 MiB default


def _round_up(n, m):
    return ((n + m - 1) // m) * m


def _choose_tile(batch, tile_b):
    """Pick the batch-tile (rows per grid step)."""
    tb = _round_up(max(int(tile_b), _ROW_ALIGN), _ROW_ALIGN)
    # v7x has 2 TensorCores; with dimension_semantics=("parallel",) grid steps are sharded
    # across them, so aim for >= 2 balanced steps whenever the batch is large enough.
    tb = min(tb, _round_up(pl.cdiv(batch, 2), _ROW_ALIGN))
    # Never use a tile (much) larger than the batch itself.
    tb = min(tb, _round_up(batch, 8))
    return max(tb, 8)


def _classifier_kernel(x_ref, w_ref, b_ref, o_ref):
    # x_ref: (tb, 512) in the streaming dtype (f32 or bf16)  -- double-buffered DMA from HBM
    # w_ref: (1, 512) f32 fused weight row                    -- VMEM-resident (constant index_map)
    # b_ref: (1, 1) f32 fused bias                            -- SMEM scalar
    # o_ref: (tb, 1) f32
    x = x_ref[...].astype(jnp.float32)                        # cast-on-load (VPU), f32 math below
    # Fused fc+fc2: one dot product per row. Broadcast-multiply (VPU) + lane reduce (XLU);
    # the MXU stays idle and the kernel is bound by the x DMA (theoretical floor).
    y = jnp.sum(x * w_ref[...], axis=-1, keepdims=True)       # (tb, 1), f32 accumulate
    y = y + b_ref[0, 0]                                       # scalar bias from SMEM
    o_ref[...] = jax.nn.sigmoid(y).astype(o_ref.dtype)        # EUP exp/recip
    # TODO(synk): the perf review also suggested a lane-dense (1, tb) output block; that requires a
    # sublane->lane relayout (transpose of the (tb, 1) per-row sums) inside the kernel. Skipped to
    # keep Mosaic lowering risk at zero; output writeback is ~4 B/row vs >= 1 KiB/row of x reads.


def classifier_forward(x, w1, b1, w2, b2, *, tile_b=4096):
    """sigmoid(fc2(fc(x))) as float32.

    x : (..., 512) activations. Streamed in its own dtype — pass bf16 to halve HBM traffic
        (the kernel always accumulates in f32).
    w1: (512, 256) fc weight, stored (in, out) i.e. transposed vs. PyTorch's (out, in).
    b1: (1, 256) / (256,)   fc bias
    w2: (256, 1)            fc2 weight (in, out)
    b2: (1, 1) / (1,)       fc2 bias
    """
    lead = x.shape[:-1]
    assert x.shape[-1] == IN_DIM, f"expected last dim {IN_DIM}, got {x.shape}"
    x2d = x.reshape(-1, IN_DIM)
    B = x2d.shape[0]

    # ---- algebraic fusion of the two Linears (no nonlinearity in between) ----
    w1f = w1.astype(jnp.float32)
    w2f = jnp.reshape(w2, (HID_DIM, OUT_DIM)).astype(jnp.float32)
    b1f = jnp.reshape(b1, (1, HID_DIM)).astype(jnp.float32)
    b2f = jnp.reshape(b2, (1, OUT_DIM)).astype(jnp.float32)
    w_row = jnp.reshape(w1f @ w2f, (1, IN_DIM))               # (1, 512) lane-dense fused weight
    b_fused = jnp.reshape(b1f @ w2f + b2f, (1, 1))            # fused scalar bias

    tb = _choose_tile(B, tile_b)
    n_tiles = pl.cdiv(B, tb)
    # No jnp.pad of x: the boundary input block hangs off the end of the array and its
    # out-of-range rows are unspecified; they only land in the padded tail of the output,
    # which is sliced off below. Output blocks divide (n_tiles * tb) exactly.

    out = pl.pallas_call(
        _classifier_kernel,
        out_shape=jax.ShapeDtypeStruct((n_tiles * tb, OUT_DIM), jnp.float32),
        grid=(n_tiles,),
        in_specs=[
            pl.BlockSpec((tb, IN_DIM), lambda i: (i, 0)),          # x: streamed per batch tile
            pl.BlockSpec((1, IN_DIM), lambda i: (0, 0)),           # fused weight row: resident
            pl.BlockSpec(memory_space=pltpu.MemorySpace.SMEM),     # fused bias: scalar path
        ],
        out_specs=pl.BlockSpec((tb, OUT_DIM), lambda i: (i, 0)),
        compiler_params=pltpu.CompilerParams(
            dimension_semantics=("parallel",),   # shard batch tiles across v7x's 2 TensorCores
            vmem_limit_bytes=_VMEM_LIMIT,        # large tiles also fit v5e's scoped VMEM
        ),
    )(x2d, w_row, b_fused)

    return out[:B].reshape(*lead, OUT_DIM)


def init_params(key):
    # Deterministic init mimicking nn.Linear default (uniform(-1/sqrt(fan_in), +1/sqrt(fan_in))).
    k1, k2, k3, k4 = jax.random.split(key, 4)
    bound1 = 1.0 / jnp.sqrt(IN_DIM)
    bound2 = 1.0 / jnp.sqrt(HID_DIM)
    # stored as [in, out] (transposed relative to PyTorch's [out, in])
    w1 = jax.random.uniform(k1, (IN_DIM, HID_DIM), jnp.float32, -bound1, bound1)
    b1 = jax.random.uniform(k2, (1, HID_DIM), jnp.float32, -bound1, bound1)
    w2 = jax.random.uniform(k3, (HID_DIM, OUT_DIM), jnp.float32, -bound2, bound2)
    b2 = jax.random.uniform(k4, (1, OUT_DIM), jnp.float32, -bound2, bound2)
    return w1, b1, w2, b2


if __name__ == "__main__":
    key = jax.random.PRNGKey(0)
    kx, kx2, kp = jax.random.split(key, 3)
    w1, b1, w2, b2 = init_params(kp)

    def reference(xf):
        # Un-fused f32 reference, exactly mirroring the PyTorch module.
        return jax.nn.sigmoid((xf @ w1 + b1) @ w2 + b2)

    # 1) Small batch, single exact tile (B == tile == 8).
    B = 8
    x = jax.random.normal(kx, (B, IN_DIM), jnp.float32)
    out = jax.block_until_ready(classifier_forward(x, w1, b1, w2, b2))
    assert out.shape == (B, OUT_DIM)
    assert jnp.allclose(out, reference(x), atol=5e-5, rtol=1e-4), "f32 single-tile mismatch"

    # 2) Ragged multi-tile path: B=300 with 128-row tiles -> grid=(3,), boundary block clamped.
    B2 = 300
    x2 = jax.random.normal(kx2, (B2, IN_DIM), jnp.float32)
    out2 = jax.block_until_ready(classifier_forward(x2, w1, b1, w2, b2, tile_b=128))
    assert out2.shape == (B2, OUT_DIM)
    assert jnp.allclose(out2, reference(x2), atol=5e-5, rtol=1e-4), "f32 ragged mismatch"

    # 3) bf16-streamed activations (half the HBM traffic), default tile -> tb=160, grid=(2,).
    out3 = jax.block_until_ready(
        classifier_forward(x2.astype(jnp.bfloat16), w1, b1, w2, b2))
    assert out3.shape == (B2, OUT_DIM)
    assert jnp.allclose(out3, reference(x2), atol=5e-3, rtol=5e-3), "bf16 streaming mismatch"

    print("KERNEL_OK")
</pallas_src>

<mosaic_0001>
module attributes {stable_mosaic.version = 11 : i64} {
  func.func @_classifier_kernel(%arg0: i32, %arg1: memref<8x512xf32, #tpu.memory_space<vmem>>, %arg2: memref<1x512xf32, #tpu.memory_space<vmem>>, %arg3: memref<1x1xf32, #tpu.memory_space<smem>>, %arg4: memref<8x1xf32, #tpu.memory_space<vmem>>) attributes {dimension_semantics = [#tpu.dimension_semantics<parallel>], iteration_bounds = array<i64: 1>, scalar_prefetch = 0 : i64, scratch_operands = 0 : i64, tpu.core_type = #tpu.core_type<tc>, window_params = [{transform_indices = @transform_0, window_bounds = array<i64: 8, 512>}, {pipeline_mode = #tpu.pipeline_mode<synchronous>, transform_indices = @transform_1, window_bounds = array<i64: 1, 512>}, {transform_indices = @transform_2, window_bounds = array<i64: 1, 1>}, {transform_indices = @transform_3, window_bounds = array<i64: 8, 1>}]} {
    %c0 = arith.constant 0 : index
    %c0_0 = arith.constant 0 : index
    %0 = vector.load %arg1[%c0, %c0_0] : memref<8x512xf32, #tpu.memory_space<vmem>>, vector<8x512xf32>
    %c0_1 = arith.constant 0 : index
    %c0_2 = arith.constant 0 : index
    %1 = vector.load %arg2[%c0_1, %c0_2] : memref<1x512xf32, #tpu.memory_space<vmem>>, vector<1x512xf32>
    %2 = vector.broadcast %1 : vector<1x512xf32> to vector<8x512xf32>
    %3 = arith.mulf %0, %2 : vector<8x512xf32>
    %cst = arith.constant dense<0.000000e+00> : vector<8xf32>
    %4 = vector.multi_reduction <add>, %3, %cst [1] : vector<8x512xf32> to vector<8xf32>
    %5 = vector.shape_cast %4 : vector<8xf32> to vector<8x1xf32>
    %c0_3 = arith.constant 0 : index
    %c0_4 = arith.constant 0 : index
    %6 = memref.load %arg3[%c0_3, %c0_4] : memref<1x1xf32, #tpu.memory_space<smem>>
    %7 = vector.broadcast %6 : f32 to vector<8x1xf32>
    %8 = arith.addf %5, %7 : vector<8x1xf32>
    %9 = arith.negf %8 : vector<8x1xf32>
    %10 = math.exp %9 : vector<8x1xf32>
    %cst_5 = arith.constant 1.000000e+00 : f32
    %11 = vector.broadcast %cst_5 : f32 to vector<8x1xf32>
    %12 = arith.addf %11, %10 : vector<8x1xf32>
    %13 = arith.divf %11, %12 : vector<8x1xf32>
    %c0_6 = arith.constant 0 : index
    %c0_7 = arith.constant 0 : index
    %14 = vector.load %arg4[%c0_6, %c0_7] : memref<8x1xf32, #tpu.memory_space<vmem>>, vector<8x1xf32>
    tpu.vector_store %arg4[%c0_6, %c0_7], %13 {strides = array<i32>} : memref<8x1xf32, #tpu.memory_space<vmem>>, vector<8x1xf32>,
    return
  }
  func.func @transform_0(%arg0: i32) -> (i32, i32) {
    %c0_i32 = arith.constant 0 : i32
    %c0_i32_0 = arith.constant 0 : i32
    return %arg0, %c0_i32 : i32, i32
  }
  func.func @transform_1(%arg0: i32) -> (i32, i32) {
    %c0_i32 = arith.constant 0 : i32
    %c0_i32_0 = arith.constant 0 : i32
    %c0_i32_1 = arith.constant 0 : i32
    return %c0_i32, %c0_i32_0 : i32, i32
  }
  func.func @transform_2(%arg0: i32) -> (i32, i32) {
    %c0_i32 = arith.constant 0 : i32
    %c0_i32_0 = arith.constant 0 : i32
    %c0_i32_1 = arith.constant 0 : i32
    return %c0_i32, %c0_i32_0 : i32, i32
  }
  func.func @transform_3(%arg0: i32) -> (i32, i32) {
    %c0_i32 = arith.constant 0 : i32
    %c0_i32_0 = arith.constant 0 : i32
    return %arg0, %c0_i32 : i32, i32
  }
}

</mosaic_0001>

<llo_original>
// kernel: tpu_custom_call.1
$region0: #{tpu_custom_call.1}
  #allocation0 [shape = 'u32[]', space=smem, size = 0x4, offset = 0x4, fixed_abs, tag = 'smem constant byte address 0x4 - core index']
  #allocation1 [shape = 'u32[144,128]{1,0:T(1,128)}', space=vmem, size = 0x12000, scoped, tag = 'internal scratch']
  #allocation2 [shape = 'f32[1,1]{1,0:T(1,128)S(6)}', space=smem, size = 0x200, scoped, tag = 'scoped memory for tpu_custom_call.1']
  %s0 = inlined_call_operand.hbm [shape: f32[8,512], index: 0, kind: input, shape index: {}]
  %s1 = inlined_call_operand.hbm [shape: f32[1,512], index: 1, kind: input, shape index: {}]
  %s2 = inlined_call_operand.<no memory space> [shape: f32[1,1], index: 2, kind: input, shape index: {}]
  %s3 = inlined_call_operand.vmem [shape: f32[8,1], index: 3, kind: output, shape index: {}]
  %s4 = sld [smem:[#allocation0]]
  $region30: #{tpu_custom_call.1} parent=0
    _
  %s6 = ssub.s32 1, %s4
  %s7 = scalar_select 0, %s6, %s4
  %8 = sst [smem:[#allocation2]] %s2
  $region1: #{tpu_custom_call.1} parent=0
    #allocation3 [shape = 'u8[16384]{0}', space=vmem, size = 0x4000, scoped, tag = 'input window, operand 0, single buffered']
    #allocation4 [shape = 's32[1]{0}', space=sflag, size = 0x4, scoped, tag = 'scoped memory for tpu_custom_call.1']
    #allocation5 [shape = 'u8[2048]{0}', space=vmem, size = 0x800, scoped, tag = 'input window, operand 1, single buffered']
    #allocation6 [shape = 's32[1]{0}', space=sflag, size = 0x4, scoped, tag = 'scoped memory for tpu_custom_call.1']
    %9 = vsyncpa [#allocation4], 0
    %10 = vsyncpa [#allocation6], 0
    // Predicated region
    $region2: #{tpu_custom_call.1} parent=1 // pred_check
      _
    $region3: #{tpu_custom_call.1} parent=1 // pred_check_branch
      %12 = sbr.rel (0) target = $region5
    $region4: #{tpu_custom_call.1} parent=1 // pred_region
      %s14 = ssub.s32 512, 512
      %15 = vsyncadd [#allocation4], %s14
      %s17 = sshll.u32 [#allocation3], 4
      %s18 = int_to_ptr.vmem [resolvable:$true] %s17
      %20 = dma.hbm_to_vmem [thread:$0]  %s0, 512, %s18, [#allocation4]
    $region5: #{tpu_custom_call.1} parent=1 // pred_fallthru
      _
    // Predicated region
    $region6: #{tpu_custom_call.1} parent=1 // pred_check
      _
    $region7: #{tpu_custom_call.1} parent=1 // pred_check_branch
      %22 = sbr.rel (0) target = $region9
    $region8: #{tpu_custom_call.1} parent=1 // pred_region
      %s24 = ssub.s32 64, 64
      %25 = vsyncadd [#allocation6], %s24
      %s27 = sshll.u32 [#allocation5], 4
      %s28 = int_to_ptr.vmem [resolvable:$true] %s27
      %30 = dma.hbm_to_vmem [thread:$0]  %s1, 64, %s28, [#allocation6]
    $region9: #{tpu_custom_call.1} parent=1 // pred_fallthru
      _
    // Predicated region
    $region10: #{tpu_custom_call.1} parent=1 // pred_check
      _
    $region11: #{tpu_custom_call.1} parent=1 // pred_check_branch
      %32 = sbr.rel (0) target = $region13
    $region12: #{tpu_custom_call.1} parent=1 // pred_region
      _
    $region13: #{tpu_custom_call.1} parent=1 // pred_fallthru
      _
    // Predicated region
    $region14: #{tpu_custom_call.1} parent=1 // pred_check
      _
    $region15: #{tpu_custom_call.1} parent=1 // pred_check_branch
      %34 = sbr.rel (0) target = $region17
    $region16: #{tpu_custom_call.1} parent=1 // pred_region
      %35 = dma.done [#allocation4], 512
    $region17: #{tpu_custom_call.1} parent=1 // pred_fallthru
      _
    // Predicated region
    $region18: #{tpu_custom_call.1} parent=1 // pred_check
      _
    $region19: #{tpu_custom_call.1} parent=1 // pred_check_branch
      %37 = sbr.rel (0) target = $region21
    $region20: #{tpu_custom_call.1} parent=1 // pred_region
      %38 = dma.done [#allocation6], 64
    $region21: #{tpu_custom_call.1} parent=1 // pred_fallthru
      _
    %v39 = vld [vmem:[#allocation3] sm:$0xff]
    %v40 = vld [vmem:[#allocation3 + $0x8] sm:$0xff]
    %v41 = vld [vmem:[#allocation3 + $0x10] sm:$0xff]
    %v42 = vld [vmem:[#allocation3 + $0x18] sm:$0xff]
    %v43 = vld [vmem:[#allocation5] sm:$0xf]
    %v45 = vlaneseq
    %v46 = vshrl.u32 %v45, 7
    %v47 = vsub.s32 0, %v46
    %v48 = vrot.slane %v43, %v47
    %v49 = vlaneseq
    %v50 = vshrl.u32 %v49, 7
    %v51 = vsub.s32 1, %v50
    %v52 = vrot.slane %v43, %v51
    %v53 = vlaneseq
    %v54 = vshrl.u32 %v53, 7
    %v55 = vsub.s32 2, %v54
    %v56 = vrot.slane %v43, %v55
    %v57 = vlaneseq
    %v58 = vshrl.u32 %v57, 7
    %v59 = vsub.s32 3, %v58
    %v60 = vrot.slane %v43, %v59
    %v65 = vmul.f32 %v39, %v48
    %v66 = vmul.f32 %v40, %v52
    %v67 = vmul.f32 %v41, %v56
    %v68 = vmul.f32 %v42, %v60
    %v69 = vadd.f32 %v65, %v66
    %v70 = vadd.f32 %v69, %v67
    %v71 = vadd.f32 %v70, %v68
    %72 = vadd.xlane.f32.xlu0 %v71
    %v73 = vpop.xlane.xlu0 %72
    %s74 = sld [smem:[#allocation2]]
    %v75 = vstv %s74
    %v76 = vadd.f32 %v73, %v75
    %v77 = vxor.u32 %v76, 2147483648
    %v78 = vmul.f32 %v77, 1.442695
    %v79 = vpow.pop %v78
    %v80 = vadd.f32 %v79, 1.0
    %v81 = vrcp.pop %v80
    %v82 = vmul.f32 1.0, %v81
    %vm83 = vcmask 7168
    %84 = vst.msk [vmem:[%s3] sm:$0xff] %vm83, %v82
    // Predicated region
    $region22: #{tpu_custom_call.1} parent=1 // pred_check
      _
    $region23: #{tpu_custom_call.1} parent=1 // pred_check_branch
      %86 = sbr.rel (0) target = $region25
    $region24: #{tpu_custom_call.1} parent=1 // pred_region
      _
    $region25: #{tpu_custom_call.1} parent=1 // pred_fallthru
      _
    // Predicated region
    $region26: #{tpu_custom_call.1} parent=1 // pred_check
      _
    $region27: #{tpu_custom_call.1} parent=1 // pred_check_branch
      %88 = sbr.rel (0) target = $region29
    $region28: #{tpu_custom_call.1} parent=1 // pred_region
      _
    $region29: #{tpu_custom_call.1} parent=1 // pred_fallthru
      _
    %89 = vsyncpa [#allocation4], 1
    %90 = vsyncpa [#allocation6], 1

</llo_original>
